<compile_context>
chip_gen: v7x
topology: tpu7x:2x2x1
jax: 0.10.0
libtpu: 0.0.40
codegen_flags: <defaults>
</compile_context>

<pallas_src>
import functools

import jax
import jax.numpy as jnp
from jax import lax
from jax.experimental import pallas as pl
from jax.experimental.pallas import tpu as pltpu


def _softplus_stable(x):
    # Single-branch numerically stable softplus (beta=1), matches F.softplus.
    return jnp.maximum(x, 0.0) + jnp.log1p(jnp.exp(-jnp.abs(x)))


def policy_beta_kernel(x_ref, wt_ref, b_ref, out_ref, *, offset):
    # x_ref:   [TB, S]   batch tile (batch on sublanes, S = full last dim)
    # wt_ref:  [2A, S]   fused transposed weights (c1 rows || c0 rows), resident
    # b_ref:   [2A, 1]   fused bias column, broadcast along lanes
    # out_ref: [2A, TB]  lane-dense (alpha || beta)^T concentrations
    z = lax.dot_general(
        wt_ref[...], x_ref[...],
        dimension_numbers=(((1,), (1,)), ((), ())),   # contract both S axes
        preferred_element_type=jnp.float32,
    )                                                  # [2A, TB]
    z = z + b_ref[...]                                 # lane broadcast of bias
    out_ref[...] = (_softplus_stable(z) + offset).astype(out_ref.dtype)


def fuse_policy_beta_params(w1, b1, w0, b0):
    """One-time fusion of the two heads into wT [2A, S] and b [2A, 1].

    w1, w0 : [S, A] (already transposed from PyTorch's [A, S]); b1, b0 : [A].
    """
    wt = jnp.concatenate([w1.T, w0.T], axis=0)          # [2A, S]
    b = jnp.concatenate([b1, b0], axis=0)[:, None]      # [2A, 1]
    return wt, b


def _round_up(n, m):
    return ((n + m - 1) // m) * m


def policy_beta_forward_fused(x, wt, b, offset=0.0, *,
                              max_batch_tile=8192, min_pallas_batch=512):
    """Returns (alpha, beta) Beta concentration parameters, each [B, A].

    x  : [B, S] float32
    wt : [2A, S] fused transposed weights (from fuse_policy_beta_params)
    b  : [2A, 1] fused bias
    """
    B, S = x.shape
    two_a = wt.shape[0]
    a_dim = two_a // 2

    # Tiny-batch fallback: pallas launch/DMA overhead dwarfs the compute at
    # the deployment shape (B~2); let XLA fuse it with surrounding ops.
    if B < min_pallas_batch:
        z = x @ wt.T + b[:, 0]
        out = jax.nn.softplus(z) + offset
        return out[:, :a_dim], out[:, a_dim:]

    # Lane-aligned batch tile (multiple of 128 so the lane-dense [2A, tb]
    # output block satisfies the (8,128) divisibility rule for any B).
    tb = min(max_batch_tile, _round_up(B, 128))
    if B > 256:
        # Guarantee >= 2 grid steps so ("parallel",) can shard the batch
        # across both TensorCores on v7x (harmless on single-TC v5e/v6e).
        tb = min(tb, _round_up(pl.cdiv(B, 2), 128))
    b_padded = _round_up(B, tb)
    x_in = jnp.pad(x, ((0, b_padded - B), (0, 0))) if b_padded != B else x
    grid = (b_padded // tb,)

    cost = pl.CostEstimate(
        flops=2 * B * S * two_a,
        transcendentals=2 * B * two_a,                  # exp + log1p per elem
        bytes_accessed=4 * (B * S + S * two_a + two_a + B * two_a),
    )

    # NOTE: offset is baked in as a static Python float; if a traced/array
    # offset is ever needed, pass it via an SMEM scalar instead.
    out_t = pl.pallas_call(
        functools.partial(policy_beta_kernel, offset=float(offset)),
        out_shape=jax.ShapeDtypeStruct((two_a, b_padded), jnp.float32),
        grid=grid,
        in_specs=[
            pl.BlockSpec((tb, S), lambda i: (i, 0)),        # x: tiled over batch
            pl.BlockSpec((two_a, S), lambda i: (0, 0)),     # fused W^T: resident
            pl.BlockSpec((two_a, 1), lambda i: (0, 0)),     # fused bias: resident
        ],
        out_specs=pl.BlockSpec((two_a, tb), lambda i: (0, i)),  # lane-dense
        compiler_params=pltpu.CompilerParams(
            dimension_semantics=("parallel",),
            # 2 double-buffered x tiles (~2 MiB at tb=8192) + double-buffered
            # output (~1 MiB) + weights: far below 32 MiB, valid on v5e/v6e/v7x.
            vmem_limit_bytes=32 * 1024 * 1024,
        ),
        cost_estimate=cost,
    )(x_in, wt, b)

    alpha = out_t[:a_dim, :B].T
    beta = out_t[a_dim:, :B].T
    return alpha, beta


def policy_beta_forward(x, w1, b1, w0, b0, offset=0.0, **kwargs):
    """Convenience wrapper fusing the per-head params each call (use the
    fused entry point for repeated inference calls)."""
    wt, b = fuse_policy_beta_params(w1, b1, w0, b0)
    return policy_beta_forward_fused(x, wt, b, offset=offset, **kwargs)


def reference_forward(x, w1, b1, w0, b0, offset=0.0):
    alpha = jax.nn.softplus(x @ w1 + b1) + offset
    beta = jax.nn.softplus(x @ w0 + b0) + offset
    return alpha, beta


if __name__ == "__main__":
    s_dim, a_dim = 32, 8
    offset = 0.5

    key = jax.random.PRNGKey(0)
    kx, kw1, kb1, kw0, kb0, kx2, kx3 = jax.random.split(key, 7)

    # Deterministic init mimicking nn.Linear: U(-1/sqrt(s_dim), 1/sqrt(s_dim)).
    bound = 1.0 / jnp.sqrt(jnp.float32(s_dim))
    w1 = jax.random.uniform(kw1, (s_dim, a_dim), jnp.float32, -bound, bound)
    b1 = jax.random.uniform(kb1, (a_dim,), jnp.float32, -bound, bound)
    w0 = jax.random.uniform(kw0, (s_dim, a_dim), jnp.float32, -bound, bound)
    b0 = jax.random.uniform(kb0, (a_dim,), jnp.float32, -bound, bound)
    wt, bfused = fuse_policy_beta_params(w1, b1, w0, b0)

    # 1) Deployment shape (B=2): exercises the small-batch XLA-fallback path.
    x_small = jax.random.normal(kx, (2, s_dim), dtype=jnp.float32)
    a_s, b_s = policy_beta_forward_fused(x_small, wt, bfused, offset=offset)
    jax.block_until_ready((a_s, b_s))
    a_ref, b_ref = reference_forward(x_small, w1, b1, w0, b0, offset=offset)
    assert a_s.shape == (2, a_dim) and b_s.shape == (2, a_dim)
    assert jnp.allclose(a_s, a_ref, atol=1e-5, rtol=1e-5)
    assert jnp.allclose(b_s, b_ref, atol=1e-5, rtol=1e-5)

    # 2) Forced Pallas path at ragged B=300: exercises batch padding and a
    #    2-step parallel grid (tb=256, b_padded=512).
    x_mid = jax.random.normal(kx2, (300, s_dim), dtype=jnp.float32)
    a_m, b_m = policy_beta_forward_fused(x_mid, wt, bfused, offset=offset,
                                         min_pallas_batch=0)
    jax.block_until_ready((a_m, b_m))
    a_mref, b_mref = reference_forward(x_mid, w1, b1, w0, b0, offset=offset)
    assert a_m.shape == (300, a_dim) and b_m.shape == (300, a_dim)
    assert jnp.allclose(a_m, a_mref, atol=1e-5, rtol=1e-5)
    assert jnp.allclose(b_m, b_mref, atol=1e-5, rtol=1e-5)

    # 3) Large batch (B=2048): default Pallas path, lane-dense output,
    #    grid=(2,) for v7x megacore sharding.
    x_big = jax.random.normal(kx3, (2048, s_dim), dtype=jnp.float32)
    a_b, b_b = policy_beta_forward_fused(x_big, wt, bfused, offset=offset)
    jax.block_until_ready((a_b, b_b))
    a_bref, b_bref = reference_forward(x_big, w1, b1, w0, b0, offset=offset)
    assert a_b.shape == (2048, a_dim) and b_b.shape == (2048, a_dim)
    assert jnp.allclose(a_b, a_bref, atol=1e-5, rtol=1e-5)
    assert jnp.allclose(b_b, b_bref, atol=1e-5, rtol=1e-5)

    # Beta concentrations must be positive (softplus(.) + offset > 0).
    assert bool(jnp.all(a_b > 0)) and bool(jnp.all(b_b > 0))

    # TODO(synk): torch.distributions.beta.Beta itself (sampling / log_prob)
    # is distribution glue, not kernel compute; the kernel returns its two
    # concentration parameters (alpha, beta).
    print("KERNEL_OK")
</pallas_src>

<mosaic_0001>
module attributes {stable_mosaic.version = 11 : i64} {
  func.func @policy_beta_kernel(%arg0: i32, %arg1: memref<256x32xf32, #tpu.memory_space<vmem>>, %arg2: memref<16x32xf32, #tpu.memory_space<vmem>>, %arg3: memref<16x1xf32, #tpu.memory_space<vmem>>, %arg4: memref<16x256xf32, #tpu.memory_space<vmem>>) attributes {dimension_semantics = [#tpu.dimension_semantics<parallel>], iteration_bounds = array<i64: 2>, scalar_prefetch = 0 : i64, scratch_operands = 0 : i64, tpu.core_type = #tpu.core_type<tc>, window_params = [{transform_indices = @transform_0, window_bounds = array<i64: 256, 32>}, {pipeline_mode = #tpu.pipeline_mode<synchronous>, transform_indices = @transform_1, window_bounds = array<i64: 16, 32>}, {pipeline_mode = #tpu.pipeline_mode<synchronous>, transform_indices = @transform_2, window_bounds = array<i64: 16, 1>}, {transform_indices = @transform_3, window_bounds = array<i64: 16, 256>}]} {
    %c0 = arith.constant 0 : index
    %c0_0 = arith.constant 0 : index
    %0 = vector.load %arg2[%c0, %c0_0] : memref<16x32xf32, #tpu.memory_space<vmem>>, vector<16x32xf32>
    %c0_1 = arith.constant 0 : index
    %c0_2 = arith.constant 0 : index
    %1 = vector.load %arg1[%c0_1, %c0_2] : memref<256x32xf32, #tpu.memory_space<vmem>>, vector<256x32xf32>
    %cst = arith.constant dense<0.000000e+00> : vector<16x256xf32>
    %2 = tpu.matmul %0, %1, %cst {dimension_numbers = #tpu.dot_dimension_numbers<[1], [1], [0], [0], [0, 0, 1, 0], [], []>} : vector<16x32xf32>, vector<256x32xf32>, vector<16x256xf32> -> vector<16x256xf32>
    %c0_3 = arith.constant 0 : index
    %c0_4 = arith.constant 0 : index
    %3 = vector.load %arg3[%c0_3, %c0_4] : memref<16x1xf32, #tpu.memory_space<vmem>>, vector<16x1xf32>
    %4 = vector.broadcast %3 : vector<16x1xf32> to vector<16x256xf32>
    %5 = arith.addf %2, %4 : vector<16x256xf32>
    %cst_5 = arith.constant 0.000000e+00 : f32
    %6 = vector.broadcast %cst_5 : f32 to vector<16x256xf32>
    %7 = arith.maximumf %5, %6 : vector<16x256xf32>
    %8 = math.absf %5 : vector<16x256xf32>
    %cst_6 = arith.constant 0.000000e+00 : f32
    %9 = vector.broadcast %cst_6 : f32 to vector<16x256xf32>
    %10 = arith.subf %9, %8 : vector<16x256xf32>
    %11 = math.exp %10 : vector<16x256xf32>
    %12 = math.log1p %11 : vector<16x256xf32>
    %13 = arith.addf %7, %12 : vector<16x256xf32>
    %cst_7 = arith.constant 5.000000e-01 : f32
    %14 = vector.broadcast %cst_7 : f32 to vector<16x256xf32>
    %15 = arith.addf %13, %14 : vector<16x256xf32>
    %c0_8 = arith.constant 0 : index
    %c0_9 = arith.constant 0 : index
    %16 = vector.load %arg4[%c0_8, %c0_9] : memref<16x256xf32, #tpu.memory_space<vmem>>, vector<16x256xf32>
    tpu.vector_store %arg4[%c0_8, %c0_9], %15 {strides = array<i32>} : memref<16x256xf32, #tpu.memory_space<vmem>>, vector<16x256xf32>,
    return
  }
  func.func @transform_0(%arg0: i32) -> (i32, i32) {
    %c0_i32 = arith.constant 0 : i32
    %c0_i32_0 = arith.constant 0 : i32
    return %arg0, %c0_i32 : i32, i32
  }
  func.func @transform_1(%arg0: i32) -> (i32, i32) {
    %c0_i32 = arith.constant 0 : i32
    %c0_i32_0 = arith.constant 0 : i32
    %c0_i32_1 = arith.constant 0 : i32
    return %c0_i32, %c0_i32_0 : i32, i32
  }
  func.func @transform_2(%arg0: i32) -> (i32, i32) {
    %c0_i32 = arith.constant 0 : i32
    %c0_i32_0 = arith.constant 0 : i32
    %c0_i32_1 = arith.constant 0 : i32
    return %c0_i32, %c0_i32_0 : i32, i32
  }
  func.func @transform_3(%arg0: i32) -> (i32, i32) {
    %c0_i32 = arith.constant 0 : i32
    %c0_i32_0 = arith.constant 0 : i32
    return %c0_i32, %arg0 : i32, i32
  }
}

</mosaic_0001>

<llo_original>
// kernel: tpu_custom_call.1
$region0: #{tpu_custom_call.1}
  #allocation0 [shape = 'u32[]', space=smem, size = 0x4, offset = 0x4, fixed_abs, tag = 'smem constant byte address 0x4 - core index']
  #allocation1 [shape = 'u32[144,128]{1,0:T(1,128)}', space=vmem, size = 0x12000, scoped, tag = 'internal scratch']
  %s0 = inlined_call_operand.vmem [shape: f32[512,32], index: 0, kind: input, shape index: {}]
  %s1 = inlined_call_operand.vmem [shape: f32[16,32], index: 1, kind: input, shape index: {}]
  %s2 = inlined_call_operand.vmem [shape: f32[16,1], index: 2, kind: input, shape index: {}]
  %s3 = inlined_call_operand.hbm [shape: f32[16,512], index: 3, kind: output, shape index: {}]
  %s4 = sld [smem:[#allocation0]]
  $region45: #{tpu_custom_call.1} parent=0
    _
  %s6 = ssub.s32 1, %s4
  %s7 = scalar_select 0, %s6, %s4
  $region1: #{tpu_custom_call.1} parent=0
    #allocation2 [shape = 'u8[32768]{0}', space=vmem, size = 0x8000, scoped, tag = 'output window, operand 0']
    #allocation3 [shape = 's32[2]{0}', space=sflag, size = 0x8, scoped, tag = 'scoped memory for tpu_custom_call.1']
    %8 = vsyncpa [#allocation3], 0
    %s9 = scalar_lea.sflag [#allocation3], 1
    %10 = vsyncpa %s9, 0
    loop: start=0, step=1, limit=4
    $region2: #{tpu_custom_call.1} parent=1 // loop_pre_header
      _
    $region3: #{tpu_custom_call.1} parent=1 // loop_header
      %s12 = sphi 0, %s16
      %p13 = scmp.ge.s32.totalorder %s12, 4
      %s22 = sphi 0, %s24
      %s25 = sphi 0, %s22
      %s26 = sphi 0, %s25
      %s42 = sphi 0, %s26
      %s46 = sphi 0, %s46
      %s48 = sphi 0, %s46
      %s49 = sphi 0, %s48
      %s63 = sphi 0, %s49
      %s67 = sphi 0, %s67
      %s69 = sphi 0, %s67
      %s70 = sphi 0, %s69
      %s84 = sphi 0, %s70
      %s90 = sphi 0, %s92
      %s93 = sphi 0, %s90
      %s94 = sphi 0, %s93
      %s110 = sphi 0, %s94
    $region4: #{tpu_custom_call.1} parent=1 // loop_header_branch
      %15 = sbr.rel (%p13) target = $region8
    $region5: #{tpu_custom_call.1} parent=1 // loop_body
      %s17 = ssub.s32 %s12, 1
      %s18 = ssub.s32 %s12, 2
      %s19 = sadd.s32 %s12, 1
      %s20 = ssub.s32 %s12, %s19
      %p21 = scmp.eq.s32.totalorder %s20, 0
      %s23 = sadd.s32 %s22, 1
      %s24 = scalar_select %p21, %s22, %s23
      %p27 = pneg %p21
      %p28 = scmp.eq.s32.totalorder %s12, 1
      %p29 = por %p27, %p28
      %p30 = scmp.ne.s32.totalorder %s22, %s25
      %p31 = scmp.eq.s32.totalorder %s12, 0
      %p32 = por %p30, %p31
      %p33 = scmp.ne.s32.totalorder %s22, %s25
      %p34 = scmp.eq.s32.totalorder %s17, 1
      %p35 = por %p33, %p34
      %p36 = scmp.ne.s32.totalorder %s25, %s26
      %p37 = scmp.eq.s32.totalorder %s17, 0
      %p38 = por %p36, %p37
      %p39 = scmp.ne.s32.totalorder %s25, %s26
      %p40 = scmp.eq.s32.totalorder %s18, 1
      %p41 = por %p39, %p40
      %p43 = scmp.ne.s32.totalorder %s26, %s42
      %p44 = scmp.eq.s32.totalorder %s18, 0
      %p45 = por %p43, %p44
      %s47 = sadd.s32 %s46, 1
      %p50 = scmp.eq.s32.totalorder %s12, 1
      %p51 = scmp.ne.s32.totalorder %s46, %s48
      %p52 = scmp.eq.s32.totalorder %s12, 0
      %p53 = por %p51, %p52
      %p54 = scmp.ne.s32.totalorder %s46, %s48
      %p55 = scmp.eq.s32.totalorder %s17, 1
      %p56 = por %p54, %p55
      %p57 = scmp.ne.s32.totalorder %s48, %s49
      %p58 = scmp.eq.s32.totalorder %s17, 0
      %p59 = por %p57, %p58
      %p60 = scmp.ne.s32.totalorder %s48, %s49
      %p61 = scmp.eq.s32.totalorder %s18, 1
      %p62 = por %p60, %p61
      %p64 = scmp.ne.s32.totalorder %s49, %s63
      %p65 = scmp.eq.s32.totalorder %s18, 0
      %p66 = por %p64, %p65
      %s68 = sadd.s32 %s67, 1
      %p71 = scmp.eq.s32.totalorder %s12, 1
      %p72 = scmp.ne.s32.totalorder %s67, %s69
      %p73 = scmp.eq.s32.totalorder %s12, 0
      %p74 = por %p72, %p73
      %p75 = scmp.ne.s32.totalorder %s67, %s69
      %p76 = scmp.eq.s32.totalorder %s17, 1
      %p77 = por %p75, %p76
      %p78 = scmp.ne.s32.totalorder %s69, %s70
      %p79 = scmp.eq.s32.totalorder %s17, 0
      %p80 = por %p78, %p79
      %p81 = scmp.ne.s32.totalorder %s69, %s70
      %p82 = scmp.eq.s32.totalorder %s18, 1
      %p83 = por %p81, %p82
      %p85 = scmp.ne.s32.totalorder %s70, %s84
      %p86 = scmp.eq.s32.totalorder %s18, 0
      %p87 = por %p85, %p86
      %s88 = ssub.s32 %s12, %s19
      %p89 = scmp.eq.s32.totalorder %s88, 0
      %s91 = sadd.s32 %s90, 1
      %s92 = scalar_select %p89, %s90, %s91
      %p95 = pneg %p89
      %p96 = scmp.eq.s32.totalorder %s12, 1
      %p97 = por %p95, %p96
      %p98 = scmp.ne.s32.totalorder %s90, %s93
      %p99 = scmp.eq.s32.totalorder %s12, 0
      %p100 = por %p98, %p99
      %p101 = scmp.ne.s32.totalorder %s90, %s93
      %p102 = scmp.eq.s32.totalorder %s17, 1
      %p103 = por %p101, %p102
      %p104 = scmp.ne.s32.totalorder %s93, %s94
      %p105 = scmp.eq.s32.totalorder %s17, 0
      %p106 = por %p104, %p105
      %p107 = scmp.ne.s32.totalorder %s93, %s94
      %p108 = scmp.eq.s32.totalorder %s18, 1
      %p109 = por %p107, %p108
      %p111 = scmp.ne.s32.totalorder %s94, %s110
      %p112 = scmp.eq.s32.totalorder %s18, 0
      %p113 = por %p111, %p112
      %p114 = scmp.le.s32.totalorder 1, %s12
      %p115 = scmp.lt.s32.totalorder %s12, 3
      %p116 = pnand %p114, %p115
      %p117 = pneg %p116
      // Predicated region
      $region9: #{tpu_custom_call.1} parent=5 // pred_check
        _
      $region10: #{tpu_custom_call.1} parent=5 // pred_check_branch
        %119 = sbr.rel (%p116) target = $region12
      $region11: #{tpu_custom_call.1} parent=5 // pred_region
        %s120 = ssub.s32 %s12, 1
        // Predicated region
        $region13: #{tpu_custom_call.1} parent=11 // pred_check
          %p121 = pneg %p59
        $region14: #{tpu_custom_call.1} parent=11 // pred_check_branch
          %123 = sbr.rel (%p121) target = $region16
        $region15: #{tpu_custom_call.1} parent=11 // pred_region
          _
        $region16: #{tpu_custom_call.1} parent=11 // pred_fallthru
          _
        // Predicated region
        $region17: #{tpu_custom_call.1} parent=11 // pred_check
          %p124 = pneg %p80
        $region18: #{tpu_custom_call.1} parent=11 // pred_check_branch
          %126 = sbr.rel (%p124) target = $region20
        $region19: #{tpu_custom_call.1} parent=11 // pred_region
          _
        $region20: #{tpu_custom_call.1} parent=11 // pred_fallthru
          _
      $region12: #{tpu_custom_call.1} parent=5 // pred_fallthru
        _
      %p127 = scmp.lt.s32.totalorder %s12, 2
      // Predicated region
      $region21: #{tpu_custom_call.1} parent=5 // pred_check
        %p128 = pneg %p127
      $region22: #{tpu_custom_call.1} parent=5 // pred_check_branch
        %130 = sbr.rel (%p128) target = $region24
      $region23: #{tpu_custom_call.1} parent=5 // pred_region
        // Predicated region
        $region25: #{tpu_custom_call.1} parent=23 // pred_check
          %p131 = pneg %p32
        $region26: #{tpu_custom_call.1} parent=23 // pred_check_branch
          %133 = sbr.rel (%p131) target = $region28
        $region27: #{tpu_custom_call.1} parent=23 // pred_region
          %s134 = smul.u32 32, %s12
          %p135 = scmp.lt.s32.totalorder %s134, 63
          %s136 = scalar_select %p135, %s134, 63
          %s137 = smul.addr %s136, 8
          %s138 = scalar_lea.vmem %s0, %s137
          %s139 = smul.u32 32, %s12
        $region28: #{tpu_custom_call.1} parent=23 // pred_fallthru
          _
      $region24: #{tpu_custom_call.1} parent=5 // pred_fallthru
        _
      %p140 = scmp.le.s32.totalorder 1, %s12
      %p141 = scmp.lt.s32.totalorder %s12, 3
      %p142 = pnand %p140, %p141
      %p143 = pneg %p142
      // Predicated region
      $region29: #{tpu_custom_call.1} parent=5 // pred_check
        _
      $region30: #{tpu_custom_call.1} parent=5 // pred_check_branch
        %145 = sbr.rel (%p142) target = $region32
      $region31: #{tpu_custom_call.1} parent=5 // pred_region
        %s146 = ssub.s32 %s12, 1
        %s147 = smul.u32 32, %s17
        %p148 = scmp.lt.s32.totalorder %s147, 63
        %s149 = scalar_select %p148, %s147, 63
        %s150 = smul.addr %s149, 8
        %s151 = scalar_lea.vmem %s0, %s150
        %p152 = pneg %p38
        %p153 = pneg %p35
        %p154 = pneg %p59
        %p155 = pneg %p56
        %p156 = pneg %p80
        %p157 = pneg %p77
        %p158 = pneg %p106
        %p159 = pneg %p103
        %s160 = sand.u32 %s93, 1
        %s161 = scalar_lea.sflag [#allocation3], %s160
        %s162 = sand.u32 %s93, 1
        %s163 = smul.addr %s162, 32
        %s164 = scalar_lea.vmem [#allocation2], %s163
        %s165 = smul.u32 32, %s17
        %p166 = scmp.lt.s32.totalorder %s165, 63
        %s167 = scalar_select %p166, %s165, 63
        %s168 = smul.addr %s167, 8
        %s169 = scalar_lea.vmem %s0, %s168
        %s170 = smul.u32 32, %s17
        %s171 = smul.u32 2, %s17
        %v172 = vld [vmem:[%s1] sm:$0xff]
        %v173 = vld [vmem:[%s1 + $0x8] sm:$0xff]
        %v174 = vld [vmem:[%s169] sm:$0xff]
        %v175 = vld [vmem:[%s169 + $0x8] sm:$0xff]
        %v176 = vld [vmem:[%s169 + $0x10] sm:$0xff]
        %v177 = vld [vmem:[%s169 + $0x18] sm:$0xff]
        %v178 = vld [vmem:[%s169 + $0x20] sm:$0xff]
        %v179 = vld [vmem:[%s169 + $0x28] sm:$0xff]
        %v180 = vld [vmem:[%s169 + $0x30] sm:$0xff]
        %v181 = vld [vmem:[%s169 + $0x38] sm:$0xff]
        %v182 = vld [vmem:[%s169 + $0x40] sm:$0xff]
        %v183 = vld [vmem:[%s169 + $0x48] sm:$0xff]
        %v184 = vld [vmem:[%s169 + $0x50] sm:$0xff]
        %v185 = vld [vmem:[%s169 + $0x58] sm:$0xff]
        %v186 = vld [vmem:[%s169 + $0x60] sm:$0xff]
        %v187 = vld [vmem:[%s169 + $0x68] sm:$0xff]
        %v188 = vld [vmem:[%s169 + $0x70] sm:$0xff]
        %v189 = vld [vmem:[%s169 + $0x78] sm:$0xff]
        %v190 = vld [vmem:[%s169 + $0x80] sm:$0xff]
        %v191 = vld [vmem:[%s169 + $0x88] sm:$0xff]
        %v192 = vld [vmem:[%s169 + $0x90] sm:$0xff]
        %v193 = vld [vmem:[%s169 + $0x98] sm:$0xff]
        %v194 = vld [vmem:[%s169 + $0xa0] sm:$0xff]
        %v195 = vld [vmem:[%s169 + $0xa8] sm:$0xff]
        %v196 = vld [vmem:[%s169 + $0xb0] sm:$0xff]
        %v197 = vld [vmem:[%s169 + $0xb8] sm:$0xff]
        %v198 = vld [vmem:[%s169 + $0xc0] sm:$0xff]
        %v199 = vld [vmem:[%s169 + $0xc8] sm:$0xff]
        %v200 = vld [vmem:[%s169 + $0xd0] sm:$0xff]
        %v201 = vld [vmem:[%s169 + $0xd8] sm:$0xff]
        %v202 = vld [vmem:[%s169 + $0xe0] sm:$0xff]
        %v203 = vld [vmem:[%s169 + $0xe8] sm:$0xff]
        %v204 = vld [vmem:[%s169 + $0xf0] sm:$0xff]
        %v205 = vld [vmem:[%s169 + $0xf8] sm:$0xff]
        %v206 = vld [vmem:[%s2] sm:$0xff]
        %v207 = vld [vmem:[%s2 + $0x8] sm:$0xff]
        %209 = vset.pattern.permute.xlu0 0
        %210 = vperm.xlu0 %209, %v206
        %v211 = vpop.permute.xlu0 %210
        %214 = vset.pattern.permute.xlu0 0
        %215 = vperm.xlu0 %214, %v207
        %v216 = vpop.permute.xlu0 %215
        %vm218 = vcmask 261120
        %v220 = vsel %vm218, %v172, 0
        %v223 = vsel %vm218, %v173, 0
        %v226 = vsel %vm218, %v174, 0
        %v229 = vsel %vm218, %v175, 0
        %v232 = vsel %vm218, %v176, 0
        %v235 = vsel %vm218, %v177, 0
        %v238 = vsel %vm218, %v178, 0
        %v241 = vsel %vm218, %v179, 0
        %v244 = vsel %vm218, %v180, 0
        %v247 = vsel %vm218, %v181, 0
        %v250 = vsel %vm218, %v182, 0
        %v253 = vsel %vm218, %v183, 0
        %v256 = vsel %vm218, %v184, 0
        %v259 = vsel %vm218, %v185, 0
        %v262 = vsel %vm218, %v186, 0
        %v265 = vsel %vm218, %v187, 0
        %v268 = vsel %vm218, %v188, 0
        %v271 = vsel %vm218, %v189, 0
        %v274 = vsel %vm218, %v190, 0
        %v277 = vsel %vm218, %v191, 0
        %v280 = vsel %vm218, %v192, 0
        %v283 = vsel %vm218, %v193, 0
        %v286 = vsel %vm218, %v194, 0
        %v289 = vsel %vm218, %v195, 0
        %v292 = vsel %vm218, %v196, 0
        %v295 = vsel %vm218, %v197, 0
        %v298 = vsel %vm218, %v198, 0
        %v301 = vsel %vm218, %v199, 0
        %v304 = vsel %vm218, %v200, 0
        %v307 = vsel %vm218, %v201, 0
        %v310 = vsel %vm218, %v202, 0
        %v313 = vsel %vm218, %v203, 0
        %v316 = vsel %vm218, %v204, 0
        %v319 = vsel %vm218, %v205, 0
        %321 = vmatprep.subr.mxu0 0.0
        %322 = vmatpush1.xpose.msra.mxu0 %v226
        %323 = vmatprep.subr.mxu0 0.0
        %324 = vmatpush1.xpose.msra.mxu0 %v229
        %325 = vmatprep.subr.mxu0 0.0
        %326 = vmatpush1.xpose.msra.mxu0 %v232
        %327 = vmatprep.subr.mxu0 0.0
        %328 = vmatpush1.xpose.msra.mxu0 %v235
        %329 = vmatprep.subr.mxu0 0.0
        %330 = vmatpush1.xpose.msra.mxu0 %v238
        %331 = vmatprep.subr.mxu0 0.0
        %332 = vmatpush1.xpose.msra.mxu0 %v241
        %333 = vmatprep.subr.mxu0 0.0
        %334 = vmatpush1.xpose.msra.mxu0 %v244
        %335 = vmatprep.subr.mxu0 0.0
        %336 = vmatpush1.xpose.msra.mxu0 %v247
        %337 = vmatprep.subr.mxu0 0.0
        %338 = vmatpush1.xpose.msra.mxu0 %v250
        %339 = vmatprep.subr.mxu0 0.0
        %340 = vmatpush1.xpose.msra.mxu0 %v253
        %341 = vmatprep.subr.mxu0 0.0
        %342 = vmatpush1.xpose.msra.mxu0 %v256
        %343 = vmatprep.subr.mxu0 0.0
        %344 = vmatpush1.xpose.msra.mxu0 %v259
        %345 = vmatprep.subr.mxu0 0.0
        %346 = vmatpush1.xpose.msra.mxu0 %v262
        %347 = vmatprep.subr.mxu0 0.0
        %348 = vmatpush1.xpose.msra.mxu0 %v265
        %349 = vmatprep.subr.mxu0 0.0
        %350 = vmatpush1.xpose.msra.mxu0 %v268
        %351 = vmatprep.subr.mxu0 0.0
        %352 = vmatpush1.xpose.msra.mxu0 %v271
        %353 = vmatprep.subr.mxu0 0.0
        %354 = vmatpush1.xpose.msra.mxu0 %v274
        %355 = vmatprep.subr.mxu0 0.0
        %356 = vmatpush1.xpose.msra.mxu0 %v277
        %357 = vmatprep.subr.mxu0 0.0
        %358 = vmatpush1.xpose.msra.mxu0 %v280
        %359 = vmatprep.subr.mxu0 0.0
        %360 = vmatpush1.xpose.msra.mxu0 %v283
        %361 = vmatprep.subr.mxu0 0.0
        %362 = vmatpush1.xpose.msra.mxu0 %v286
        %363 = vmatprep.subr.mxu0 0.0
        %364 = vmatpush1.xpose.msra.mxu0 %v289
        %365 = vmatprep.subr.mxu0 0.0
        %366 = vmatpush1.xpose.msra.mxu0 %v292
        %367 = vmatprep.subr.mxu0 0.0
        %368 = vmatpush1.xpose.msra.mxu0 %v295
        %369 = vmatprep.subr.mxu0 0.0
        %370 = vmatpush1.xpose.msra.mxu0 %v298
        %371 = vmatprep.subr.mxu0 0.0
        %372 = vmatpush1.xpose.msra.mxu0 %v301
        %373 = vmatprep.subr.mxu0 0.0
        %374 = vmatpush1.xpose.msra.mxu0 %v304
        %375 = vmatprep.subr.mxu0 0.0
        %376 = vmatpush1.xpose.msra.mxu0 %v307
        %377 = vmatprep.subr.mxu0 0.0
        %378 = vmatpush1.xpose.msra.mxu0 %v310
        %379 = vmatprep.subr.mxu0 0.0
        %380 = vmatpush1.xpose.msra.mxu0 %v313
        %381 = vmatprep.subr.mxu0 0.0
        %382 = vmatpush1.xpose.msra.mxu0 %v316
        %383 = vmatprep.subr.mxu0 0.0
        %384 = vmatpush1.xpose.msra.mxu0 %v319
        %385 = vmatprep.mubr.f32.mxu0 0.0
        %386 = vmatmul.mubr.f32.gmra.mrb[0].mxu0 %v220
        %v387 = vpop.f32.mrb[0].mxu0
        %v388 = vadd.f32 %v211, %v387
        %v389 = vpop.f32.mrb[0].mxu0
        %v390 = vadd.f32 %v211, %v389
        %391 = vmatprep.mubr.f32.mxu0 0.0
        %392 = vmatmul.mubr.f32.gmra.mrb[0].mxu0 %v223
        %v393 = vpop.f32.mrb[0].mxu0
        %v394 = vadd.f32 %v216, %v393
        %v395 = vpop.f32.mrb[0].mxu0
        %v396 = vadd.f32 %v216, %v395
        %397 = vdwg.mxu0
        %v398 = vmax.f32 %v388, 0.0
        %v399 = vmax.f32 %v390, 0.0
        %v400 = vmax.f32 %v394, 0.0
        %v401 = vmax.f32 %v396, 0.0
        %v402 = vand.u32 2147483647, %v388
        %v403 = vand.u32 2147483647, %v390
        %v404 = vand.u32 2147483647, %v394
        %v405 = vand.u32 2147483647, %v396
        %v406 = vsub.f32 0.0, %v402
        %v407 = vsub.f32 0.0, %v403
        %v408 = vsub.f32 0.0, %v404
        %v409 = vsub.f32 0.0, %v405
        %v410 = vmul.f32 %v406, 1.442695
        %v411 = vpow.pop %v410
        %v412 = vmul.f32 %v407, 1.442695
        %v413 = vpow.pop %v412
        %v414 = vmul.f32 %v408, 1.442695
        %v415 = vpow.pop %v414
        %v416 = vmul.f32 %v409, 1.442695
        %v417 = vpow.pop %v416
        %v418 = vadd.f32 %v411, 1.0
        %v419 = vlog2.pop %v418
        %v420 = vmul.f32 %v419, 0.6931472
        %v421 = vmul.f32 -0.5, %v411
        %v422 = vadd.f32 %v421, 1.0
        %v423 = vmul.f32 %v422, %v411
        %v424 = vand.u32 2147483647, %v411
        %vm425 = vcmp.lt.f32.partialorder %v424, 0.0004427343
        %v426 = vsel %vm425, %v423, %v420
        %v427 = vadd.f32 %v413, 1.0
        %v428 = vlog2.pop %v427
        %v429 = vmul.f32 %v428, 0.6931472
        %v430 = vmul.f32 -0.5, %v413
        %v431 = vadd.f32 %v430, 1.0
        %v432 = vmul.f32 %v431, %v413
        %v433 = vand.u32 2147483647, %v413
        %vm434 = vcmp.lt.f32.partialorder %v433, 0.0004427343
        %v435 = vsel %vm434, %v432, %v429
        %v436 = vadd.f32 %v415, 1.0
        %v437 = vlog2.pop %v436
        %v438 = vmul.f32 %v437, 0.6931472
        %v439 = vmul.f32 -0.5, %v415
        %v440 = vadd.f32 %v439, 1.0
        %v441 = vmul.f32 %v440, %v415
        %v442 = vand.u32 2147483647, %v415
        %vm443 = vcmp.lt.f32.partialorder %v442, 0.0004427343
        %v444 = vsel %vm443, %v441, %v438
        %v445 = vadd.f32 %v417, 1.0
        %v446 = vlog2.pop %v445
        %v447 = vmul.f32 %v446, 0.6931472
        %v448 = vmul.f32 -0.5, %v417
        %v449 = vadd.f32 %v448, 1.0
        %v450 = vmul.f32 %v449, %v417
        %v451 = vand.u32 2147483647, %v417
        %vm452 = vcmp.lt.f32.partialorder %v451, 0.0004427343
        %v453 = vsel %vm452, %v450, %v447
        %v454 = vadd.f32 %v398, %v426
        %v455 = vadd.f32 %v399, %v435
        %v456 = vadd.f32 %v400, %v444
        %v457 = vadd.f32 %v401, %v453
        %v458 = vadd.f32 %v454, 0.5
        %v459 = vadd.f32 %v455, 0.5
        %v460 = vadd.f32 %v456, 0.5
        %v461 = vadd.f32 %v457, 0.5
        %462 = vst [vmem:[%s164] sm:$0xff] %v458
        %463 = vst [vmem:[%s164 + $0x8] sm:$0xff] %v459
        %464 = vst [vmem:[%s164 + $0x10] sm:$0xff] %v460
        %465 = vst [vmem:[%s164 + $0x18] sm:$0xff] %v461
        %s466 = sand.u32 %s93, 1
        %s467 = scalar_lea.sflag [#allocation3], %s466
        %s468 = sand.u32 %s93, 1
        %s469 = smul.addr %s468, 32
        %s470 = scalar_lea.vmem [#allocation2], %s469
        // Predicated region
        $region33: #{tpu_custom_call.1} parent=31 // pred_check
          %p471 = pneg %p103
        $region34: #{tpu_custom_call.1} parent=31 // pred_check_branch
          %473 = sbr.rel (%p471) target = $region36
        $region35: #{tpu_custom_call.1} parent=31 // pred_region
          %s474 = smul.u32 2, %s17
          %s476 = ssub.s32 512, 512
          %477 = vsyncadd %s467, %s476
          %s478 = smul.addr %s474, 128
          %s479 = scalar_lea.hbm %s3, %s478
          %s480 = sshll.u32 %s470, 4
          %s481 = int_to_ptr.vmem [resolvable:$true] %s480
          %486 = dma.vmem_to_hbm [thread:$0]  %s481, 512, %s479, %s467, 256, 512, 16
        $region36: #{tpu_custom_call.1} parent=31 // pred_fallthru
          _
      $region32: #{tpu_custom_call.1} parent=5 // pred_fallthru
        _
      %p487 = scmp.le.s32.totalorder 2, %s12
      // Predicated region
      $region37: #{tpu_custom_call.1} parent=5 // pred_check
        %p488 = pneg %p487
      $region38: #{tpu_custom_call.1} parent=5 // pred_check_branch
        %490 = sbr.rel (%p488) target = $region40
      $region39: #{tpu_custom_call.1} parent=5 // pred_region
        %s491 = ssub.s32 %s12, 2
        // Predicated region
        $region41: #{tpu_custom_call.1} parent=39 // pred_check
          %p492 = pneg %p109
        $region42: #{tpu_custom_call.1} parent=39 // pred_check_branch
          %494 = sbr.rel (%p492) target = $region44
        $region43: #{tpu_custom_call.1} parent=39 // pred_region
          %s495 = sand.u32 %s94, 1
          %s496 = scalar_lea.sflag [#allocation3], %s495
          %s497 = sand.u32 %s94, 1
          %s498 = smul.addr %s497, 32
          %s499 = scalar_lea.vmem [#allocation2], %s498
          %500 = dma.done %s496, 512
        $region44: #{tpu_custom_call.1} parent=39 // pred_fallthru
          _
      $region40: #{tpu_custom_call.1} parent=5 // pred_fallthru
        _
    $region6: #{tpu_custom_call.1} parent=1 // loop_footer
      %s16 = sadd.s32 1, %s12
    $region7: #{tpu_custom_call.1} parent=1 // loop_footer_branch
      %11 = sbr.rel target = $region3
    $region8: #{tpu_custom_call.1} parent=1 // loop_exit
      _
    %501 = vsyncpa [#allocation3], 1
    %s502 = scalar_lea.sflag [#allocation3], 1
    %503 = vsyncpa %s502, 1

</llo_original>
